<compile_context>
chip_gen: v7x
topology: tpu7x:2x2x1
jax: 0.10.0
libtpu: 0.0.40
codegen_flags: <defaults>
</compile_context>

<pallas_src>
import functools

import jax
import jax.numpy as jnp
import numpy as np
from jax.experimental import pallas as pl
from jax.experimental.pallas import tpu as pltpu


def _spatial_attention_kernel(x_ref, w_ref, b_ref, o_ref, pad_ref, *, H, W):
    """x_ref: (bb, C, H*W) VMEM; w_ref: (9,) SMEM; b_ref: (1,) SMEM;
    o_ref: (bb, 1, H*W) VMEM; pad_ref: (bb, 1, H*W + 2*(W+1)) VMEM scratch."""
    HW = H * W
    P = W + 1                       # zero padding on each side of the flat axis
    bb = x_ref.shape[0]

    x = x_ref[...]                                              # (bb, C, HW)
    # Channel pooling: mean + max over the channel (sublane) axis.  Only the
    # small pooled map is promoted to f32; x stays in its native dtype.
    pooled = (jnp.mean(x, axis=1, keepdims=True)
              + jnp.max(x, axis=1, keepdims=True)).astype(jnp.float32)  # (bb,1,HW)

    # Zero-padded flat line used to read the 9 conv taps as shifted slices.
    pad_ref[...] = jnp.zeros_like(pad_ref)
    pad_ref[:, :, P:P + HW] = pooled

    # Column index of every flattened position (horizontal boundary masks).
    col = jax.lax.broadcasted_iota(jnp.int32, (bb, 1, HW), 2) % W
    mask_l = col > 0          # source column j-1 exists
    mask_r = col < (W - 1)    # source column j+1 exists

    # out[i, j] = bias + sum_{di,dj} w[di+1, dj+1] * pooled[i+di, j+dj]  (zero pad)
    acc = jnp.zeros((bb, 1, HW), jnp.float32) + b_ref[0]
    for di in (-1, 0, 1):
        for dj in (-1, 0, 1):
            s = di * W + dj
            tap = pad_ref[:, :, P + s:P + s + HW]  # tap[k] = pooled[k+s], 0 outside
            if dj == -1:
                tap = jnp.where(mask_l, tap, 0.0)
            elif dj == 1:
                tap = jnp.where(mask_r, tap, 0.0)
            acc = acc + w_ref[(di + 1) * 3 + (dj + 1)] * tap

    o_ref[...] = jax.nn.sigmoid(acc).astype(o_ref.dtype)


def spatial_attention(x, conv_w, conv_b, *, block_bytes=2 << 20):
    """x: (B, C, H, W);  conv_w: (1, 1, 3, 3);  conv_b: (1,).  Returns (B, 1, H, W)."""
    B, C, H, W = x.shape
    HW = H * W
    x_flat = x.reshape(B, C, HW)

    # Batch-fused block: largest divisor of B whose x-block stays <= block_bytes.
    per_batch = C * HW * x.dtype.itemsize
    bb = int(max(1, min(B, block_bytes // max(per_batch, 1))))
    while B % bb:
        bb -= 1

    w_flat = conv_w.reshape(9).astype(jnp.float32)
    b_flat = conv_b.reshape(1).astype(jnp.float32)

    kernel = functools.partial(_spatial_attention_kernel, H=H, W=W)

    out_flat = pl.pallas_call(
        kernel,
        out_shape=jax.ShapeDtypeStruct((B, 1, HW), x.dtype),
        grid_spec=pltpu.PrefetchScalarGridSpec(
            num_scalar_prefetch=0,
            grid=(B // bb,),
            in_specs=[
                pl.BlockSpec((bb, C, HW), lambda i: (i, 0, 0)),
                pl.BlockSpec(memory_space=pltpu.MemorySpace.SMEM),
                pl.BlockSpec(memory_space=pltpu.MemorySpace.SMEM),
            ],
            out_specs=pl.BlockSpec((bb, 1, HW), lambda i: (i, 0, 0)),
            scratch_shapes=[pltpu.VMEM((bb, 1, HW + 2 * (W + 1)), jnp.float32)],
        ),
        compiler_params=pltpu.CompilerParams(
            dimension_semantics=("parallel",),
        ),
    )(x_flat, w_flat, b_flat)

    return out_flat.reshape(B, 1, H, W)


def _reference(x, conv_w, conv_b):
    pooled = (jnp.mean(x, axis=1, keepdims=True)
              + jnp.max(x, axis=1, keepdims=True)).astype(jnp.float32)
    out = jax.lax.conv_general_dilated(
        pooled, conv_w.astype(jnp.float32),
        window_strides=(1, 1), padding=((1, 1), (1, 1)),
        dimension_numbers=("NCHW", "OIHW", "NCHW"))
    out = out + conv_b.astype(jnp.float32).reshape(1, 1, 1, 1)
    return jax.nn.sigmoid(out).astype(x.dtype)


if __name__ == "__main__":
    key = jax.random.PRNGKey(0)
    B, C, H, W = 2, 4, 16, 16
    kx, kw, kb = jax.random.split(key, 3)

    x = jax.random.normal(kx, (B, C, H, W), dtype=jnp.float32)
    # PyTorch Conv2d(1, 1, kernel_size=3, padding=1) params.
    fan_in = 1 * 3 * 3
    bound = 1.0 / np.sqrt(fan_in)
    conv_w = jax.random.uniform(kw, (1, 1, 3, 3), jnp.float32, -bound, bound)
    conv_b = jax.random.uniform(kb, (1,), jnp.float32, -bound, bound)

    out = spatial_attention(x, conv_w, conv_b)
    out = jax.block_until_ready(out)

    ref = _reference(x, conv_w, conv_b)
    np.testing.assert_allclose(np.asarray(out), np.asarray(ref), rtol=1e-5, atol=1e-5)

    print("KERNEL_OK")
</pallas_src>

<mosaic_0001>
module attributes {stable_mosaic.version = 11 : i64} {
  func.func @_spatial_attention_kernel(%arg0: i32, %arg1: memref<2x4x256xf32, #tpu.memory_space<vmem>>, %arg2: memref<9xf32, #tpu.memory_space<smem>>, %arg3: memref<1xf32, #tpu.memory_space<smem>>, %arg4: memref<2x1x256xf32, #tpu.memory_space<vmem>>, %arg5: memref<2x1x290xf32, #tpu.memory_space<vmem>>) attributes {dimension_semantics = [#tpu.dimension_semantics<parallel>], iteration_bounds = array<i64: 1>, scalar_prefetch = 0 : i64, scratch_operands = 1 : i64, tpu.core_type = #tpu.core_type<tc>, window_params = [{transform_indices = @transform_0, window_bounds = array<i64: 2, 4, 256>}, {transform_indices = @transform_1, window_bounds = array<i64: 9>}, {transform_indices = @transform_2, window_bounds = array<i64: 1>}, {transform_indices = @transform_3, window_bounds = array<i64: 2, 1, 256>}]} {
    %c0 = arith.constant 0 : index
    %c0_0 = arith.constant 0 : index
    %c0_1 = arith.constant 0 : index
    %0 = vector.load %arg1[%c0, %c0_0, %c0_1] : memref<2x4x256xf32, #tpu.memory_space<vmem>>, vector<2x4x256xf32>
    %cst = arith.constant dense<0.000000e+00> : vector<2x256xf32>
    %1 = vector.multi_reduction <add>, %0, %cst [1] : vector<2x4x256xf32> to vector<2x256xf32>
    %2 = vector.shape_cast %1 : vector<2x256xf32> to vector<2x1x256xf32>
    %cst_2 = arith.constant 4.000000e+00 : f32
    %3 = vector.broadcast %cst_2 : f32 to vector<2x1x256xf32>
    %4 = arith.divf %2, %3 : vector<2x1x256xf32>
    %cst_3 = arith.constant dense<0xFF800000> : vector<2x256xf32>
    %5 = vector.multi_reduction <maximumf>, %0, %cst_3 [1] : vector<2x4x256xf32> to vector<2x256xf32>
    %6 = vector.shape_cast %5 : vector<2x256xf32> to vector<2x1x256xf32>
    %7 = arith.addf %4, %6 : vector<2x1x256xf32>
    %cst_4 = arith.constant 0.000000e+00 : f32
    %8 = vector.broadcast %cst_4 : f32 to vector<2x1x290xf32>
    %c0_5 = arith.constant 0 : index
    %c0_6 = arith.constant 0 : index
    %c0_7 = arith.constant 0 : index
    %9 = vector.load %arg5[%c0_5, %c0_6, %c0_7] : memref<2x1x290xf32, #tpu.memory_space<vmem>>, vector<2x1x290xf32>
    tpu.vector_store %arg5[%c0_5, %c0_6, %c0_7], %8 {strides = array<i32>} : memref<2x1x290xf32, #tpu.memory_space<vmem>>, vector<2x1x290xf32>,
    %c0_8 = arith.constant 0 : index
    %c0_9 = arith.constant 0 : index
    %c17 = arith.constant 17 : index
    %10 = vector.load %arg5[%c0_8, %c0_9, %c17] : memref<2x1x290xf32, #tpu.memory_space<vmem>>, vector<2x1x256xf32>
    tpu.vector_store %arg5[%c0_8, %c0_9, %c17], %7 {strides = array<i32>} : memref<2x1x290xf32, #tpu.memory_space<vmem>>, vector<2x1x256xf32>,
    %11 = tpu.iota {dimensions = array<i32: 2>} : vector<2x1x256xi32>
    %c16_i32 = arith.constant 16 : i32
    %c0_i32 = arith.constant 0 : i32
    %12 = arith.cmpi eq, %c16_i32, %c0_i32 : i32
    %c1_i32 = arith.constant 1 : i32
    %13 = arith.select %12, %c1_i32, %c16_i32 : i32
    %14 = vector.broadcast %13 : i32 to vector<2x1x256xi32>
    %15 = arith.remsi %11, %14 : vector<2x1x256xi32>
    %c0_i32_10 = arith.constant 0 : i32
    %16 = vector.broadcast %c0_i32_10 : i32 to vector<2x1x256xi32>
    %17 = arith.cmpi ne, %15, %16 : vector<2x1x256xi32>
    %c0_i32_11 = arith.constant 0 : i32
    %18 = vector.broadcast %c0_i32_11 : i32 to vector<2x1x256xi32>
    %19 = arith.cmpi slt, %15, %18 : vector<2x1x256xi32>
    %c0_i32_12 = arith.constant 0 : i32
    %20 = arith.cmpi slt, %13, %c0_i32_12 : i32
    %21 = vector.broadcast %20 : i1 to vector<2x1x256xi1>
    %22 = vector.broadcast %21 : vector<2x1x256xi1> to vector<2x1x256xi1>
    %23 = arith.xori %19, %22 : vector<2x1x256xi1>
    %24 = arith.andi %23, %17 : vector<2x1x256xi1>
    %25 = vector.broadcast %13 : i32 to vector<2x1x256xi32>
    %26 = arith.addi %15, %25 : vector<2x1x256xi32>
    %27 = arith.select %24, %26, %15 : vector<2x1x256xi1>, vector<2x1x256xi32>
    %c0_i32_13 = arith.constant 0 : i32
    %28 = vector.broadcast %c0_i32_13 : i32 to vector<2x1x256xi32>
    %29 = arith.cmpi sgt, %27, %28 : vector<2x1x256xi32>
    %c15_i32 = arith.constant 15 : i32
    %30 = vector.broadcast %c15_i32 : i32 to vector<2x1x256xi32>
    %31 = arith.cmpi slt, %27, %30 : vector<2x1x256xi32>
    %cst_14 = arith.constant 0.000000e+00 : f32
    %32 = vector.broadcast %cst_14 : f32 to vector<2x1x256xf32>
    %c0_15 = arith.constant 0 : index
    %33 = memref.load %arg3[%c0_15] : memref<1xf32, #tpu.memory_space<smem>>
    %34 = vector.broadcast %33 : f32 to vector<2x1x256xf32>
    %35 = arith.addf %32, %34 : vector<2x1x256xf32>
    %c0_16 = arith.constant 0 : index
    %c0_17 = arith.constant 0 : index
    %c0_18 = arith.constant 0 : index
    %36 = vector.load %arg5[%c0_16, %c0_17, %c0_18] : memref<2x1x290xf32, #tpu.memory_space<vmem>>, vector<2x1x256xf32>
    %cst_19 = arith.constant 0.000000e+00 : f32
    %37 = vector.broadcast %cst_19 : f32 to vector<2x1x256xf32>
    %38 = arith.select %29, %36, %37 : vector<2x1x256xi1>, vector<2x1x256xf32>
    %c0_20 = arith.constant 0 : index
    %39 = memref.load %arg2[%c0_20] : memref<9xf32, #tpu.memory_space<smem>>
    %40 = vector.broadcast %39 : f32 to vector<2x1x256xf32>
    %41 = arith.mulf %40, %38 : vector<2x1x256xf32>
    %42 = arith.addf %35, %41 : vector<2x1x256xf32>
    %c0_21 = arith.constant 0 : index
    %c0_22 = arith.constant 0 : index
    %c1 = arith.constant 1 : index
    %43 = vector.load %arg5[%c0_21, %c0_22, %c1] : memref<2x1x290xf32, #tpu.memory_space<vmem>>, vector<2x1x256xf32>
    %c1_23 = arith.constant 1 : index
    %44 = memref.load %arg2[%c1_23] : memref<9xf32, #tpu.memory_space<smem>>
    %45 = vector.broadcast %44 : f32 to vector<2x1x256xf32>
    %46 = arith.mulf %45, %43 : vector<2x1x256xf32>
    %47 = arith.addf %42, %46 : vector<2x1x256xf32>
    %c0_24 = arith.constant 0 : index
    %c0_25 = arith.constant 0 : index
    %c2 = arith.constant 2 : index
    %48 = vector.load %arg5[%c0_24, %c0_25, %c2] : memref<2x1x290xf32, #tpu.memory_space<vmem>>, vector<2x1x256xf32>
    %cst_26 = arith.constant 0.000000e+00 : f32
    %49 = vector.broadcast %cst_26 : f32 to vector<2x1x256xf32>
    %50 = arith.select %31, %48, %49 : vector<2x1x256xi1>, vector<2x1x256xf32>
    %c2_27 = arith.constant 2 : index
    %51 = memref.load %arg2[%c2_27] : memref<9xf32, #tpu.memory_space<smem>>
    %52 = vector.broadcast %51 : f32 to vector<2x1x256xf32>
    %53 = arith.mulf %52, %50 : vector<2x1x256xf32>
    %54 = arith.addf %47, %53 : vector<2x1x256xf32>
    %c0_28 = arith.constant 0 : index
    %c0_29 = arith.constant 0 : index
    %c16 = arith.constant 16 : index
    %55 = vector.load %arg5[%c0_28, %c0_29, %c16] : memref<2x1x290xf32, #tpu.memory_space<vmem>>, vector<2x1x256xf32>
    %cst_30 = arith.constant 0.000000e+00 : f32
    %56 = vector.broadcast %cst_30 : f32 to vector<2x1x256xf32>
    %57 = arith.select %29, %55, %56 : vector<2x1x256xi1>, vector<2x1x256xf32>
    %c3 = arith.constant 3 : index
    %58 = memref.load %arg2[%c3] : memref<9xf32, #tpu.memory_space<smem>>
    %59 = vector.broadcast %58 : f32 to vector<2x1x256xf32>
    %60 = arith.mulf %59, %57 : vector<2x1x256xf32>
    %61 = arith.addf %54, %60 : vector<2x1x256xf32>
    %c0_31 = arith.constant 0 : index
    %c0_32 = arith.constant 0 : index
    %c17_33 = arith.constant 17 : index
    %62 = vector.load %arg5[%c0_31, %c0_32, %c17_33] : memref<2x1x290xf32, #tpu.memory_space<vmem>>, vector<2x1x256xf32>
    %c4 = arith.constant 4 : index
    %63 = memref.load %arg2[%c4] : memref<9xf32, #tpu.memory_space<smem>>
    %64 = vector.broadcast %63 : f32 to vector<2x1x256xf32>
    %65 = arith.mulf %64, %62 : vector<2x1x256xf32>
    %66 = arith.addf %61, %65 : vector<2x1x256xf32>
    %c0_34 = arith.constant 0 : index
    %c0_35 = arith.constant 0 : index
    %c18 = arith.constant 18 : index
    %67 = vector.load %arg5[%c0_34, %c0_35, %c18] : memref<2x1x290xf32, #tpu.memory_space<vmem>>, vector<2x1x256xf32>
    %cst_36 = arith.constant 0.000000e+00 : f32
    %68 = vector.broadcast %cst_36 : f32 to vector<2x1x256xf32>
    %69 = arith.select %31, %67, %68 : vector<2x1x256xi1>, vector<2x1x256xf32>
    %c5 = arith.constant 5 : index
    %70 = memref.load %arg2[%c5] : memref<9xf32, #tpu.memory_space<smem>>
    %71 = vector.broadcast %70 : f32 to vector<2x1x256xf32>
    %72 = arith.mulf %71, %69 : vector<2x1x256xf32>
    %73 = arith.addf %66, %72 : vector<2x1x256xf32>
    %c0_37 = arith.constant 0 : index
    %c0_38 = arith.constant 0 : index
    %c32 = arith.constant 32 : index
    %74 = vector.load %arg5[%c0_37, %c0_38, %c32] : memref<2x1x290xf32, #tpu.memory_space<vmem>>, vector<2x1x256xf32>
    %cst_39 = arith.constant 0.000000e+00 : f32
    %75 = vector.broadcast %cst_39 : f32 to vector<2x1x256xf32>
    %76 = arith.select %29, %74, %75 : vector<2x1x256xi1>, vector<2x1x256xf32>
    %c6 = arith.constant 6 : index
    %77 = memref.load %arg2[%c6] : memref<9xf32, #tpu.memory_space<smem>>
    %78 = vector.broadcast %77 : f32 to vector<2x1x256xf32>
    %79 = arith.mulf %78, %76 : vector<2x1x256xf32>
    %80 = arith.addf %73, %79 : vector<2x1x256xf32>
    %c0_40 = arith.constant 0 : index
    %c0_41 = arith.constant 0 : index
    %c33 = arith.constant 33 : index
    %81 = vector.load %arg5[%c0_40, %c0_41, %c33] : memref<2x1x290xf32, #tpu.memory_space<vmem>>, vector<2x1x256xf32>
    %c7 = arith.constant 7 : index
    %82 = memref.load %arg2[%c7] : memref<9xf32, #tpu.memory_space<smem>>
    %83 = vector.broadcast %82 : f32 to vector<2x1x256xf32>
    %84 = arith.mulf %83, %81 : vector<2x1x256xf32>
    %85 = arith.addf %80, %84 : vector<2x1x256xf32>
    %c0_42 = arith.constant 0 : index
    %c0_43 = arith.constant 0 : index
    %c34 = arith.constant 34 : index
    %86 = vector.load %arg5[%c0_42, %c0_43, %c34] : memref<2x1x290xf32, #tpu.memory_space<vmem>>, vector<2x1x256xf32>
    %cst_44 = arith.constant 0.000000e+00 : f32
    %87 = vector.broadcast %cst_44 : f32 to vector<2x1x256xf32>
    %88 = arith.select %31, %86, %87 : vector<2x1x256xi1>, vector<2x1x256xf32>
    %c8 = arith.constant 8 : index
    %89 = memref.load %arg2[%c8] : memref<9xf32, #tpu.memory_space<smem>>
    %90 = vector.broadcast %89 : f32 to vector<2x1x256xf32>
    %91 = arith.mulf %90, %88 : vector<2x1x256xf32>
    %92 = arith.addf %85, %91 : vector<2x1x256xf32>
    %93 = arith.negf %92 : vector<2x1x256xf32>
    %94 = math.exp %93 : vector<2x1x256xf32>
    %cst_45 = arith.constant 1.000000e+00 : f32
    %95 = vector.broadcast %cst_45 : f32 to vector<2x1x256xf32>
    %96 = arith.addf %95, %94 : vector<2x1x256xf32>
    %97 = arith.divf %95, %96 : vector<2x1x256xf32>
    %c0_46 = arith.constant 0 : index
    %c0_47 = arith.constant 0 : index
    %c0_48 = arith.constant 0 : index
    %98 = vector.load %arg4[%c0_46, %c0_47, %c0_48] : memref<2x1x256xf32, #tpu.memory_space<vmem>>, vector<2x1x256xf32>
    tpu.vector_store %arg4[%c0_46, %c0_47, %c0_48], %97 {strides = array<i32>} : memref<2x1x256xf32, #tpu.memory_space<vmem>>, vector<2x1x256xf32>,
    return
  }
  func.func @transform_0(%arg0: i32) -> (i32, i32, i32) {
    %c0_i32 = arith.constant 0 : i32
    %c0_i32_0 = arith.constant 0 : i32
    %c0_i32_1 = arith.constant 0 : i32
    return %arg0, %c0_i32, %c0_i32_0 : i32, i32, i32
  }
  func.func @transform_1(%arg0: i32) -> i32 {
    %c0_i32 = arith.constant 0 : i32
    %c0_i32_0 = arith.constant 0 : i32
    return %c0_i32 : i32
  }
  func.func @transform_2(%arg0: i32) -> i32 {
    %c0_i32 = arith.constant 0 : i32
    %c0_i32_0 = arith.constant 0 : i32
    return %c0_i32 : i32
  }
  func.func @transform_3(%arg0: i32) -> (i32, i32, i32) {
    %c0_i32 = arith.constant 0 : i32
    %c0_i32_0 = arith.constant 0 : i32
    %c0_i32_1 = arith.constant 0 : i32
    return %arg0, %c0_i32, %c0_i32_0 : i32, i32, i32
  }
}

</mosaic_0001>

<llo_original>
// kernel: tpu_custom_call.1
$region0: #{tpu_custom_call.1}
  #allocation0 [shape = 'u32[]', space=smem, size = 0x4, offset = 0x4, fixed_abs, tag = 'smem constant byte address 0x4 - core index']
  #allocation1 [shape = 'u32[144,128]{1,0:T(1,128)}', space=vmem, size = 0x12000, scoped, tag = 'internal scratch']
  #allocation2 [shape = 'f32[2,1,290]{2,1,0:T(1,128)}', space=vmem, size = 0xc00, scoped, tag = 'scratch operand']
  #allocation3 [shape = 'f32[1]{0:T(128)S(6)}', space=smem, size = 0x200, scoped, tag = 'scoped memory for tpu_custom_call.1']
  %s0 = inlined_call_operand.hbm [shape: f32[2,4,256], index: 0, kind: input, shape index: {}]
  %s1 = inlined_call_operand.vmem [shape: f32[9], index: 1, kind: input, shape index: {}]
  %s2 = inlined_call_operand.<no memory space> [shape: f32[1], index: 2, kind: input, shape index: {}]
  %s3 = inlined_call_operand.hbm [shape: f32[2,1,256], index: 3, kind: output, shape index: {}]
  %s4 = sld [smem:[#allocation0]]
  $region30: #{tpu_custom_call.1} parent=0
    _
  %s6 = ssub.s32 1, %s4
  %s7 = scalar_select 0, %s6, %s4
  %8 = sst [smem:[#allocation3]] %s2
  $region1: #{tpu_custom_call.1} parent=0
    #allocation4 [shape = 'u8[8192]{0}', space=vmem, size = 0x2000, scoped, tag = 'input window, operand 0, single buffered']
    #allocation5 [shape = 's32[1]{0}', space=sflag, size = 0x4, scoped, tag = 'scoped memory for tpu_custom_call.1']
    #allocation6 [shape = 's32[1]{0}', space=sflag, size = 0x4, scoped, tag = 'scoped memory for tpu_custom_call.1']
    #allocation7 [shape = 's32[1]{0}', space=sflag, size = 0x4, scoped, tag = 'scoped memory for tpu_custom_call.1']
    #allocation8 [shape = 'u8[512]{0}', space=smem, size = 0x200, scoped, tag = 'input window, operand 1, single buffered']
    #allocation9 [shape = 'u8[2048]{0}', space=vmem, size = 0x800, scoped, tag = 'output window, operand 0, single buffered']
    %9 = vsyncpa [#allocation5], 0
    %10 = vsyncpa [#allocation7], 0
    %11 = vsyncpa [#allocation6], 0
    // Predicated region
    $region2: #{tpu_custom_call.1} parent=1 // pred_check
      _
    $region3: #{tpu_custom_call.1} parent=1 // pred_check_branch
      %13 = sbr.rel (0) target = $region5
    $region4: #{tpu_custom_call.1} parent=1 // pred_region
      %s15 = ssub.s32 256, 256
      %16 = vsyncadd [#allocation5], %s15
      %s17 = sshll.u32 [#allocation4], 4
      %s18 = int_to_ptr.vmem [resolvable:$true] %s17
      %23 = dma.hbm_to_vmem [thread:$0]  %s0, 256, %s18, [#allocation5], 128, 128, 8
    $region5: #{tpu_custom_call.1} parent=1 // pred_fallthru
      _
    // Predicated region
    $region6: #{tpu_custom_call.1} parent=1 // pred_check
      _
    $region7: #{tpu_custom_call.1} parent=1 // pred_check_branch
      %25 = sbr.rel (0) target = $region9
    $region8: #{tpu_custom_call.1} parent=1 // pred_region
      %s27 = ssub.s32 16, 16
      %28 = vsyncadd [#allocation7], %s27
      %s30 = sshll.u32 %s1, 4
      %s31 = int_to_ptr.vmem [resolvable:$true] %s30
      %33 = dma.vmem_to_smem %s31, 16, [#allocation8], [#allocation7]
    $region9: #{tpu_custom_call.1} parent=1 // pred_fallthru
      _
    // Predicated region
    $region10: #{tpu_custom_call.1} parent=1 // pred_check
      _
    $region11: #{tpu_custom_call.1} parent=1 // pred_check_branch
      %35 = sbr.rel (0) target = $region13
    $region12: #{tpu_custom_call.1} parent=1 // pred_region
      _
    $region13: #{tpu_custom_call.1} parent=1 // pred_fallthru
      _
    // Predicated region
    $region14: #{tpu_custom_call.1} parent=1 // pred_check
      _
    $region15: #{tpu_custom_call.1} parent=1 // pred_check_branch
      %37 = sbr.rel (0) target = $region17
    $region16: #{tpu_custom_call.1} parent=1 // pred_region
      %38 = dma.done [#allocation5], 256
    $region17: #{tpu_custom_call.1} parent=1 // pred_fallthru
      _
    // Predicated region
    $region18: #{tpu_custom_call.1} parent=1 // pred_check
      _
    $region19: #{tpu_custom_call.1} parent=1 // pred_check_branch
      %40 = sbr.rel (0) target = $region21
    $region20: #{tpu_custom_call.1} parent=1 // pred_region
      %41 = dma.done [#allocation7], 16
    $region21: #{tpu_custom_call.1} parent=1 // pred_fallthru
      _
    %42 = sfence
    %v43 = vld [vmem:[#allocation4] sm:$0xff]
    %v44 = vld [vmem:[#allocation4 + $0x8] sm:$0xff]
    %v47 = vcombine.high %v43, %v43
    %v48 = vcombine.high %v44, %v44
    %vm51 = vcmask 1043456
    %v52 = vsel %vm51, %v43, 0.0
    %v53 = vrot.slane %v52, 4
    %v54 = vadd.f32 %v52, %v53
    %v55 = vrot.slane %v54, 2
    %v56 = vadd.f32 %v54, %v55
    %v57 = vrot.slane %v56, 1
    %v58 = vadd.f32 %v56, %v57
    %v59 = vsel %vm51, %v47, 0.0
    %v60 = vrot.slane %v59, 4
    %v61 = vadd.f32 %v59, %v60
    %v62 = vrot.slane %v61, 2
    %v63 = vadd.f32 %v61, %v62
    %v64 = vrot.slane %v63, 1
    %v65 = vadd.f32 %v63, %v64
    %v66 = vsel %vm51, %v44, 0.0
    %v67 = vrot.slane %v66, 4
    %v68 = vadd.f32 %v66, %v67
    %v69 = vrot.slane %v68, 2
    %v70 = vadd.f32 %v68, %v69
    %v71 = vrot.slane %v70, 1
    %v72 = vadd.f32 %v70, %v71
    %v73 = vsel %vm51, %v48, 0.0
    %v74 = vrot.slane %v73, 4
    %v75 = vadd.f32 %v73, %v74
    %v76 = vrot.slane %v75, 2
    %v77 = vadd.f32 %v75, %v76
    %v78 = vrot.slane %v77, 1
    %v79 = vadd.f32 %v77, %v78
    %v80 = vrcp.pop 4.0
    %v81 = vmul.f32 %v58, %v80
    %v82 = vmul.f32 %v65, %v80
    %v83 = vmul.f32 %v72, %v80
    %v84 = vmul.f32 %v79, %v80
    %v85 = vsel %vm51, %v43, -inf
    %v86 = vrot.slane %v85, 4
    %v87 = vmax.f32 %v85, %v86
    %v88 = vrot.slane %v87, 2
    %v89 = vmax.f32 %v87, %v88
    %v90 = vrot.slane %v89, 1
    %v91 = vmax.f32 %v89, %v90
    %v92 = vsel %vm51, %v47, -inf
    %v93 = vrot.slane %v92, 4
    %v94 = vmax.f32 %v92, %v93
    %v95 = vrot.slane %v94, 2
    %v96 = vmax.f32 %v94, %v95
    %v97 = vrot.slane %v96, 1
    %v98 = vmax.f32 %v96, %v97
    %v99 = vsel %vm51, %v44, -inf
    %v100 = vrot.slane %v99, 4
    %v101 = vmax.f32 %v99, %v100
    %v102 = vrot.slane %v101, 2
    %v103 = vmax.f32 %v101, %v102
    %v104 = vrot.slane %v103, 1
    %v105 = vmax.f32 %v103, %v104
    %v106 = vsel %vm51, %v48, -inf
    %v107 = vrot.slane %v106, 4
    %v108 = vmax.f32 %v106, %v107
    %v109 = vrot.slane %v108, 2
    %v110 = vmax.f32 %v108, %v109
    %v111 = vrot.slane %v110, 1
    %v112 = vmax.f32 %v110, %v111
    %v113 = vadd.f32 %v81, %v91
    %v114 = vadd.f32 %v82, %v98
    %v115 = vadd.f32 %v83, %v105
    %v116 = vadd.f32 %v84, %v112
    %v117 = vlaneseq
    %vm118 = vcmp.ge.s32.totalorder %v117, 0
    %vm119 = vcmp.lt.s32.totalorder %v117, 290
    %vm120 = vmand %vm118, %vm119
    %121 = vst.msk [vmem:[#allocation2] sm:$0x7] %vm120, 0.0
    %122 = vst.msk [vmem:[#allocation2 + $0x3] sm:$0x7] %vm120, 0.0
    %v127 = vcombine.low %v113, %v114
    %v129 = vunpack.c.l.s4 1966171168
    %v130 = vunpack.c.0.s8 %v129
    %v131 = vlaneseq
    %v132 = vshrl.u32 %v131, 7
    %v133 = vsub.s32 %v130, %v132
    %v134 = vrot.slane %v127, %v133
    %v136 = vunpack.c.l.s4 1966171168
    %v137 = vunpack.c.0.s8 %v136
    %v138 = vlaneseq
    %v139 = vshrl.u32 %v138, 7
    %v140 = vsub.s32 %v137, %v139
    %v141 = vrot.slane %v134, %v140
    %v142 = vcombine.low %v115, %v116
    %v144 = vunpack.c.l.s4 1966171168
    %v145 = vunpack.c.0.s8 %v144
    %v146 = vlaneseq
    %v147 = vshrl.u32 %v146, 7
    %v148 = vsub.s32 %v145, %v147
    %v149 = vrot.slane %v142, %v148
    %v151 = vunpack.c.l.s4 1966171168
    %v152 = vunpack.c.0.s8 %v151
    %v153 = vlaneseq
    %v154 = vshrl.u32 %v153, 7
    %v155 = vsub.s32 %v152, %v154
    %v156 = vrot.slane %v149, %v155
    %157 = vrot.lane.b32.xlu0 %v141, 17
    %v158 = vpop.permute.xlu0 %157
    %159 = vrot.lane.b32.xlu0 %v156, 17
    %v160 = vpop.permute.xlu0 %159
    %v161 = vrot.slane %v158, 7
    %v162 = vrot.slane %v160, 7
    %vm163 = vcmask 138240
    %v164 = vsel %vm163, %v161, %v158
    %v165 = vsel %vm163, %v162, %v160
    %vm168 = vcmp.ge.s32.totalorder %v117, 17
    %vm169 = vcmp.lt.s32.totalorder %v117, 273
    %vm170 = vmand %vm168, %vm169
    %171 = vst.msk [vmem:[#allocation2] sm:$0x7] %vm170, %v164
    %172 = vst.msk [vmem:[#allocation2 + $0x3] sm:$0x7] %vm170, %v165
    %v173 = vlaneseq
    %v174 = vand.u32 %v173, 127
    %v175 = vadd.s32 %v174, 128
    %vm176 = vcmp.lt.s32.totalorder %v174, 0
    %v177 = vsub.s32 0, %v174
    %v178 = vsel %vm176, %v177, %v174
    %v179 = vshrl.u32 %v178, 4
    %v180 = vand.u32 %v178, 15
    %v181 = vsub.s32 0, %v180
    %v182 = vsel %vm176, %v181, %v180
    %vm183 = vcmp.lt.s32.totalorder %v175, 0
    %v184 = vsub.s32 0, %v175
    %v185 = vsel %vm183, %v184, %v175
    %v186 = vshrl.u32 %v185, 4
    %v187 = vand.u32 %v185, 15
    %v188 = vsub.s32 0, %v187
    %v189 = vsel %vm183, %v188, %v187
    %vm190 = vcmp.ne.s32.totalorder %v182, 0
    %vm191 = vcmp.ne.s32.totalorder %v189, 0
    %vm192 = vcmp.lt.s32.totalorder %v182, 0
    %vm193 = vcmp.lt.s32.totalorder %v189, 0
    %vm194 = vmand %vm192, %vm190
    %vm195 = vmand %vm193, %vm191
    %v196 = vadd.s32 %v182, 16
    %v197 = vadd.s32 %v189, 16
    %v198 = vsel %vm194, %v196, %v182
    %v199 = vsel %vm195, %v197, %v189
    %vm200 = vcmp.gt.s32.totalorder %v198, 0
    %vm201 = vcmp.gt.s32.totalorder %v199, 0
    %vm202 = vcmp.lt.s32.totalorder %v198, 15
    %vm203 = vcmp.lt.s32.totalorder %v199, 15
    %s204 = sld [smem:[#allocation3]]
    %v205 = vstv %s204
    %v206 = vadd.f32 %v205, 0.0
    %v207 = vld [vmem:[#allocation2] sm:$0x3]
    %v208 = vld [vmem:[#allocation2 + $0x3] sm:$0x3]
    %v211 = vlaneseq
    %v212 = vshrl.u32 %v211, 7
    %v213 = vsub.s32 0, %v212
    %v214 = vrot.slane %v207, %v213
    %v215 = vlaneseq
    %v216 = vshrl.u32 %v215, 7
    %v217 = vsub.s32 1, %v216
    %v218 = vrot.slane %v207, %v217
    %v219 = vlaneseq
    %v220 = vshrl.u32 %v219, 7
    %v221 = vsub.s32 0, %v220
    %v222 = vrot.slane %v208, %v221
    %v223 = vlaneseq
    %v224 = vshrl.u32 %v223, 7
    %v225 = vsub.s32 1, %v224
    %v226 = vrot.slane %v208, %v225
    %v231 = vsel %vm200, %v214, 0.0
    %v232 = vsel %vm201, %v218, 0.0
    %v233 = vsel %vm200, %v222, 0.0
    %v234 = vsel %vm201, %v226, 0.0
    %s235 = sld [smem:[#allocation8]]
    %v236 = vstv %s235
    %v237 = vmul.f32 %v236, %v231
    %v238 = vmul.f32 %v236, %v232
    %v239 = vmul.f32 %v236, %v233
    %v240 = vmul.f32 %v236, %v234
    %v241 = vadd.f32 %v206, %v237
    %v242 = vadd.f32 %v206, %v238
    %v243 = vadd.f32 %v206, %v239
    %v244 = vadd.f32 %v206, %v240
    %v245 = vld [vmem:[#allocation2] sm:$0x7]
    %v246 = vld [vmem:[#allocation2 + $0x3] sm:$0x7]
    %s247 = sld [smem:[#allocation8 + $0x1]]
    %v248 = vstv %s247
    %v249 = vmul.f32 %v248, %v245
    %v250 = vmul.f32 %v248, %v246
    %v253 = vlaneseq
    %v254 = vshrl.u32 %v253, 7
    %v255 = vsub.s32 0, %v254
    %v256 = vrot.slane %v249, %v255
    %v257 = vlaneseq
    %v258 = vshrl.u32 %v257, 7
    %v259 = vsub.s32 1, %v258
    %v260 = vrot.slane %v249, %v259
    %v261 = vlaneseq
    %v262 = vshrl.u32 %v261, 7
    %v263 = vsub.s32 2, %v262
    %v264 = vrot.slane %v249, %v263
    %v265 = vlaneseq
    %v266 = vshrl.u32 %v265, 7
    %v267 = vsub.s32 0, %v266
    %v268 = vrot.slane %v250, %v267
    %v269 = vlaneseq
    %v270 = vshrl.u32 %v269, 7
    %v271 = vsub.s32 1, %v270
    %v272 = vrot.slane %v250, %v271
    %v273 = vlaneseq
    %v274 = vshrl.u32 %v273, 7
    %v275 = vsub.s32 2, %v274
    %v276 = vrot.slane %v250, %v275
    %277 = vrot.lane.b32.xlu0 %v256, 127
    %v278 = vpop.permute.xlu0 %277
    %279 = vrot.lane.b32.xlu0 %v260, 127
    %v280 = vpop.permute.xlu0 %279
    %281 = vrot.lane.b32.xlu0 %v264, 127
    %v282 = vpop.permute.xlu0 %281
    %283 = vrot.lane.b32.xlu0 %v268, 127
    %v284 = vpop.permute.xlu0 %283
    %285 = vrot.lane.b32.xlu0 %v272, 127
    %v286 = vpop.permute.xlu0 %285
    %287 = vrot.lane.b32.xlu0 %v276, 127
    %v288 = vpop.permute.xlu0 %287
    %vm289 = vcmask 1039360
    %v290 = vsel %vm289, %v278, %v280
    %v291 = vsel %vm289, %v280, %v282
    %v292 = vsel %vm289, %v284, %v286
    %v293 = vsel %vm289, %v286, %v288
    %v298 = vadd.f32 %v241, %v290
    %v299 = vadd.f32 %v242, %v291
    %v300 = vadd.f32 %v243, %v292
    %v301 = vadd.f32 %v244, %v293
    %v304 = vlaneseq
    %v305 = vshrl.u32 %v304, 7
    %v306 = vsub.s32 0, %v305
    %v307 = vrot.slane %v245, %v306
    %v308 = vlaneseq
    %v309 = vshrl.u32 %v308, 7
    %v310 = vsub.s32 1, %v309
    %v311 = vrot.slane %v245, %v310
    %v312 = vlaneseq
    %v313 = vshrl.u32 %v312, 7
    %v314 = vsub.s32 2, %v313
    %v315 = vrot.slane %v245, %v314
    %v316 = vlaneseq
    %v317 = vshrl.u32 %v316, 7
    %v318 = vsub.s32 0, %v317
    %v319 = vrot.slane %v246, %v318
    %v320 = vlaneseq
    %v321 = vshrl.u32 %v320, 7
    %v322 = vsub.s32 1, %v321
    %v323 = vrot.slane %v246, %v322
    %v324 = vlaneseq
    %v325 = vshrl.u32 %v324, 7
    %v326 = vsub.s32 2, %v325
    %v327 = vrot.slane %v246, %v326
    %328 = vrot.lane.b32.xlu0 %v307, 126
    %v329 = vpop.permute.xlu0 %328
    %330 = vrot.lane.b32.xlu0 %v311, 126
    %v331 = vpop.permute.xlu0 %330
    %332 = vrot.lane.b32.xlu0 %v315, 126
    %v333 = vpop.permute.xlu0 %332
    %334 = vrot.lane.b32.xlu0 %v319, 126
    %v335 = vpop.permute.xlu0 %334
    %336 = vrot.lane.b32.xlu0 %v323, 126
    %v337 = vpop.permute.xlu0 %336
    %338 = vrot.lane.b32.xlu0 %v327, 126
    %v339 = vpop.permute.xlu0 %338
    %vm340 = vcmask 1031168
    %v341 = vsel %vm340, %v329, %v331
    %v342 = vsel %vm340, %v331, %v333
    %v343 = vsel %vm340, %v335, %v337
    %v344 = vsel %vm340, %v337, %v339
    %v349 = vsel %vm202, %v341, 0.0
    %v350 = vsel %vm203, %v342, 0.0
    %v351 = vsel %vm202, %v343, 0.0
    %v352 = vsel %vm203, %v344, 0.0
    %s353 = sld [smem:[#allocation8 + $0x2]]
    %v354 = vstv %s353
    %v355 = vmul.f32 %v354, %v349
    %v356 = vmul.f32 %v354, %v350
    %v357 = vmul.f32 %v354, %v351
    %v358 = vmul.f32 %v354, %v352
    %v359 = vadd.f32 %v298, %v355
    %v360 = vadd.f32 %v299, %v356
    %v361 = vadd.f32 %v300, %v357
    %v362 = vadd.f32 %v301, %v358
    %363 = vrot.lane.b32.xlu0 %v307, 112
    %v364 = vpop.permute.xlu0 %363
    %365 = vrot.lane.b32.xlu0 %v311, 112
    %v366 = vpop.permute.xlu0 %365
    %367 = vrot.lane.b32.xlu0 %v315, 112
    %v368 = vpop.permute.xlu0 %367
    %369 = vrot.lane.b32.xlu0 %v319, 112
    %v370 = vpop.permute.xlu0 %369
    %371 = vrot.lane.b32.xlu0 %v323, 112
    %v372 = vpop.permute.xlu0 %371
    %373 = vrot.lane.b32.xlu0 %v327, 112
    %v374 = vpop.permute.xlu0 %373
    %vm375 = vcmask 916480
    %v376 = vsel %vm375, %v364, %v366
    %v377 = vsel %vm375, %v366, %v368
    %v378 = vsel %vm375, %v370, %v372
    %v379 = vsel %vm375, %v372, %v374
    %v384 = vsel %vm200, %v376, 0.0
    %v385 = vsel %vm201, %v377, 0.0
    %v386 = vsel %vm200, %v378, 0.0
    %v387 = vsel %vm201, %v379, 0.0
    %s388 = sld [smem:[#allocation8 + $0x3]]
    %v389 = vstv %s388
    %v390 = vmul.f32 %v389, %v384
    %v391 = vmul.f32 %v389, %v385
    %v392 = vmul.f32 %v389, %v386
    %v393 = vmul.f32 %v389, %v387
    %v394 = vadd.f32 %v359, %v390
    %v395 = vadd.f32 %v360, %v391
    %v396 = vadd.f32 %v361, %v392
    %v397 = vadd.f32 %v362, %v393
    %s398 = sld [smem:[#allocation8 + $0x4]]
    %v399 = vstv %s398
    %v400 = vmul.f32 %v399, %v245
    %v401 = vmul.f32 %v399, %v246
    %v404 = vlaneseq
    %v405 = vshrl.u32 %v404, 7
    %v406 = vsub.s32 0, %v405
    %v407 = vrot.slane %v400, %v406
    %v408 = vlaneseq
    %v409 = vshrl.u32 %v408, 7
    %v410 = vsub.s32 1, %v409
    %v411 = vrot.slane %v400, %v410
    %v412 = vlaneseq
    %v413 = vshrl.u32 %v412, 7
    %v414 = vsub.s32 2, %v413
    %v415 = vrot.slane %v400, %v414
    %v416 = vlaneseq
    %v417 = vshrl.u32 %v416, 7
    %v418 = vsub.s32 0, %v417
    %v419 = vrot.slane %v401, %v418
    %v420 = vlaneseq
    %v421 = vshrl.u32 %v420, 7
    %v422 = vsub.s32 1, %v421
    %v423 = vrot.slane %v401, %v422
    %v424 = vlaneseq
    %v425 = vshrl.u32 %v424, 7
    %v426 = vsub.s32 2, %v425
    %v427 = vrot.slane %v401, %v426
    %428 = vrot.lane.b32.xlu0 %v407, 111
    %v429 = vpop.permute.xlu0 %428
    %430 = vrot.lane.b32.xlu0 %v411, 111
    %v431 = vpop.permute.xlu0 %430
    %432 = vrot.lane.b32.xlu0 %v415, 111
    %v433 = vpop.permute.xlu0 %432
    %434 = vrot.lane.b32.xlu0 %v419, 111
    %v435 = vpop.permute.xlu0 %434
    %436 = vrot.lane.b32.xlu0 %v423, 111
    %v437 = vpop.permute.xlu0 %436
    %438 = vrot.lane.b32.xlu0 %v427, 111
    %v439 = vpop.permute.xlu0 %438
    %vm440 = vcmask 908288
    %v441 = vsel %vm440, %v429, %v431
    %v442 = vsel %vm440, %v431, %v433
    %v443 = vsel %vm440, %v435, %v437
    %v444 = vsel %vm440, %v437, %v439
    %v449 = vadd.f32 %v394, %v441
    %v450 = vadd.f32 %v395, %v442
    %v451 = vadd.f32 %v396, %v443
    %v452 = vadd.f32 %v397, %v444
    %453 = vrot.lane.b32.xlu0 %v307, 110
    %v454 = vpop.permute.xlu0 %453
    %455 = vrot.lane.b32.xlu0 %v311, 110
    %v456 = vpop.permute.xlu0 %455
    %457 = vrot.lane.b32.xlu0 %v315, 110
    %v458 = vpop.permute.xlu0 %457
    %459 = vrot.lane.b32.xlu0 %v319, 110
    %v460 = vpop.permute.xlu0 %459
    %461 = vrot.lane.b32.xlu0 %v323, 110
    %v462 = vpop.permute.xlu0 %461
    %463 = vrot.lane.b32.xlu0 %v327, 110
    %v464 = vpop.permute.xlu0 %463
    %vm465 = vcmask 900096
    %v466 = vsel %vm465, %v454, %v456
    %v467 = vsel %vm465, %v456, %v458
    %v468 = vsel %vm465, %v460, %v462
    %v469 = vsel %vm465, %v462, %v464
    %v474 = vsel %vm202, %v466, 0.0
    %v475 = vsel %vm203, %v467, 0.0
    %v476 = vsel %vm202, %v468, 0.0
    %v477 = vsel %vm203, %v469, 0.0
    %s478 = sld [smem:[#allocation8 + $0x5]]
    %v479 = vstv %s478
    %v480 = vmul.f32 %v479, %v474
    %v481 = vmul.f32 %v479, %v475
    %v482 = vmul.f32 %v479, %v476
    %v483 = vmul.f32 %v479, %v477
    %v484 = vadd.f32 %v449, %v480
    %v485 = vadd.f32 %v450, %v481
    %v486 = vadd.f32 %v451, %v482
    %v487 = vadd.f32 %v452, %v483
    %488 = vrot.lane.b32.xlu0 %v307, 96
    %v489 = vpop.permute.xlu0 %488
    %490 = vrot.lane.b32.xlu0 %v311, 96
    %v491 = vpop.permute.xlu0 %490
    %492 = vrot.lane.b32.xlu0 %v315, 96
    %v493 = vpop.permute.xlu0 %492
    %494 = vrot.lane.b32.xlu0 %v319, 96
    %v495 = vpop.permute.xlu0 %494
    %496 = vrot.lane.b32.xlu0 %v323, 96
    %v497 = vpop.permute.xlu0 %496
    %498 = vrot.lane.b32.xlu0 %v327, 96
    %v499 = vpop.permute.xlu0 %498
    %vm500 = vcmask 785408
    %v501 = vsel %vm500, %v489, %v491
    %v502 = vsel %vm500, %v491, %v493
    %v503 = vsel %vm500, %v495, %v497
    %v504 = vsel %vm500, %v497, %v499
    %v509 = vsel %vm200, %v501, 0.0
    %v510 = vsel %vm201, %v502, 0.0
    %v511 = vsel %vm200, %v503, 0.0
    %v512 = vsel %vm201, %v504, 0.0
    %s513 = sld [smem:[#allocation8 + $0x6]]
    %v514 = vstv %s513
    %v515 = vmul.f32 %v514, %v509
    %v516 = vmul.f32 %v514, %v510
    %v517 = vmul.f32 %v514, %v511
    %v518 = vmul.f32 %v514, %v512
    %v519 = vadd.f32 %v484, %v515
    %v520 = vadd.f32 %v485, %v516
    %v521 = vadd.f32 %v486, %v517
    %v522 = vadd.f32 %v487, %v518
    %s523 = sld [smem:[#allocation8 + $0x7]]
    %v524 = vstv %s523
    %v525 = vmul.f32 %v524, %v245
    %v526 = vmul.f32 %v524, %v246
    %v529 = vlaneseq
    %v530 = vshrl.u32 %v529, 7
    %v531 = vsub.s32 0, %v530
    %v532 = vrot.slane %v525, %v531
    %v533 = vlaneseq
    %v534 = vshrl.u32 %v533, 7
    %v535 = vsub.s32 1, %v534
    %v536 = vrot.slane %v525, %v535
    %v537 = vlaneseq
    %v538 = vshrl.u32 %v537, 7
    %v539 = vsub.s32 2, %v538
    %v540 = vrot.slane %v525, %v539
    %v541 = vlaneseq
    %v542 = vshrl.u32 %v541, 7
    %v543 = vsub.s32 0, %v542
    %v544 = vrot.slane %v526, %v543
    %v545 = vlaneseq
    %v546 = vshrl.u32 %v545, 7
    %v547 = vsub.s32 1, %v546
    %v548 = vrot.slane %v526, %v547
    %v549 = vlaneseq
    %v550 = vshrl.u32 %v549, 7
    %v551 = vsub.s32 2, %v550
    %v552 = vrot.slane %v526, %v551
    %553 = vrot.lane.b32.xlu0 %v532, 95
    %v554 = vpop.permute.xlu0 %553
    %555 = vrot.lane.b32.xlu0 %v536, 95
    %v556 = vpop.permute.xlu0 %555
    %557 = vrot.lane.b32.xlu0 %v540, 95
    %v558 = vpop.permute.xlu0 %557
    %559 = vrot.lane.b32.xlu0 %v544, 95
    %v560 = vpop.permute.xlu0 %559
    %561 = vrot.lane.b32.xlu0 %v548, 95
    %v562 = vpop.permute.xlu0 %561
    %563 = vrot.lane.b32.xlu0 %v552, 95
    %v564 = vpop.permute.xlu0 %563
    %vm565 = vcmask 777216
    %v566 = vsel %vm565, %v554, %v556
    %v567 = vsel %vm565, %v556, %v558
    %v568 = vsel %vm565, %v560, %v562
    %v569 = vsel %vm565, %v562, %v564
    %v574 = vadd.f32 %v519, %v566
    %v575 = vadd.f32 %v520, %v567
    %v576 = vadd.f32 %v521, %v568
    %v577 = vadd.f32 %v522, %v569
    %578 = vrot.lane.b32.xlu0 %v307, 94
    %v579 = vpop.permute.xlu0 %578
    %580 = vrot.lane.b32.xlu0 %v311, 94
    %v581 = vpop.permute.xlu0 %580
    %582 = vrot.lane.b32.xlu0 %v315, 94
    %v583 = vpop.permute.xlu0 %582
    %584 = vrot.lane.b32.xlu0 %v319, 94
    %v585 = vpop.permute.xlu0 %584
    %586 = vrot.lane.b32.xlu0 %v323, 94
    %v587 = vpop.permute.xlu0 %586
    %588 = vrot.lane.b32.xlu0 %v327, 94
    %v589 = vpop.permute.xlu0 %588
    %vm590 = vcmask 769024
    %v591 = vsel %vm590, %v579, %v581
    %v592 = vsel %vm590, %v581, %v583
    %v593 = vsel %vm590, %v585, %v587
    %v594 = vsel %vm590, %v587, %v589
    %v599 = vsel %vm202, %v591, 0.0
    %v600 = vsel %vm203, %v592, 0.0
    %v601 = vsel %vm202, %v593, 0.0
    %v602 = vsel %vm203, %v594, 0.0
    %s603 = sld [smem:[#allocation8 + $0x8]]
    %v604 = vstv %s603
    %v605 = vmul.f32 %v604, %v599
    %v606 = vmul.f32 %v604, %v600
    %v607 = vmul.f32 %v604, %v601
    %v608 = vmul.f32 %v604, %v602
    %v609 = vadd.f32 %v574, %v605
    %v610 = vadd.f32 %v575, %v606
    %v611 = vadd.f32 %v576, %v607
    %v612 = vadd.f32 %v577, %v608
    %v613 = vxor.u32 %v609, 2147483648
    %v614 = vxor.u32 %v610, 2147483648
    %v615 = vxor.u32 %v611, 2147483648
    %v616 = vxor.u32 %v612, 2147483648
    %v617 = vmul.f32 %v613, 1.442695
    %v618 = vpow.pop %v617
    %v619 = vmul.f32 %v614, 1.442695
    %v620 = vpow.pop %v619
    %v621 = vmul.f32 %v615, 1.442695
    %v622 = vpow.pop %v621
    %v623 = vmul.f32 %v616, 1.442695
    %v624 = vpow.pop %v623
    %v625 = vadd.f32 %v618, 1.0
    %v626 = vadd.f32 %v620, 1.0
    %v627 = vadd.f32 %v622, 1.0
    %v628 = vadd.f32 %v624, 1.0
    %v629 = vrcp.pop %v625
    %v630 = vmul.f32 1.0, %v629
    %v631 = vrcp.pop %v626
    %v632 = vmul.f32 1.0, %v631
    %v633 = vrcp.pop %v627
    %v634 = vmul.f32 1.0, %v633
    %v635 = vrcp.pop %v628
    %v636 = vmul.f32 1.0, %v635
    %v641 = vcombine.low %v630, %v632
    %v643 = vunpack.c.l.s4 1966171168
    %v644 = vunpack.c.0.s8 %v643
    %v645 = vlaneseq
    %v646 = vshrl.u32 %v645, 7
    %v647 = vsub.s32 %v644, %v646
    %v648 = vrot.slane %v641, %v647
    %v650 = vunpack.c.l.s4 1966171168
    %v651 = vunpack.c.0.s8 %v650
    %v652 = vlaneseq
    %v653 = vshrl.u32 %v652, 7
    %v654 = vsub.s32 %v651, %v653
    %v655 = vrot.slane %v648, %v654
    %v656 = vcombine.low %v634, %v636
    %v658 = vunpack.c.l.s4 1966171168
    %v659 = vunpack.c.0.s8 %v658
    %v660 = vlaneseq
    %v661 = vshrl.u32 %v660, 7
    %v662 = vsub.s32 %v659, %v661
    %v663 = vrot.slane %v656, %v662
    %v665 = vunpack.c.l.s4 1966171168
    %v666 = vunpack.c.0.s8 %v665
    %v667 = vlaneseq
    %v668 = vshrl.u32 %v667, 7
    %v669 = vsub.s32 %v666, %v668
    %v670 = vrot.slane %v663, %v669
    %vm673 = vcmp.lt.s32.totalorder %v117, 256
    %vm674 = vmand %vm118, %vm673
    %675 = vst.msk [vmem:[#allocation9] sm:$0x3] %vm674, %v655
    %676 = vst.msk [vmem:[#allocation9 + $0x2] sm:$0x3] %vm674, %v670
    // Predicated region
    $region22: #{tpu_custom_call.1} parent=1 // pred_check
      _
    $region23: #{tpu_custom_call.1} parent=1 // pred_check_branch
      %678 = sbr.rel (0) target = $region25
    $region24: #{tpu_custom_call.1} parent=1 // pred_region
      %s680 = ssub.s32 64, 64
      %681 = vsyncadd [#allocation6], %s680
      %s682 = sshll.u32 [#allocation9], 4
      %s683 = int_to_ptr.vmem [resolvable:$true] %s682
      %688 = dma.vmem_to_hbm [thread:$0]  %s683, 64, %s3, [#allocation6], 32, 32, 2
    $region25: #{tpu_custom_call.1} parent=1 // pred_fallthru
      _
    // Predicated region
    $region26: #{tpu_custom_call.1} parent=1 // pred_check
      _
    $region27: #{tpu_custom_call.1} parent=1 // pred_check_branch
      %690 = sbr.rel (0) target = $region29
    $region28: #{tpu_custom_call.1} parent=1 // pred_region
      %691 = dma.done [#allocation6], 64
    $region29: #{tpu_custom_call.1} parent=1 // pred_fallthru
      _
    %692 = vsyncpa [#allocation5], 1
    %693 = vsyncpa [#allocation6], 1
    %694 = vsyncpa [#allocation7], 1

</llo_original>
